<compile_context>
chip_gen: v5e
topology: v5e:2x2
jax: 0.10.0
libtpu: 0.0.40
codegen_flags: <defaults>
</compile_context>

<pallas_src>
import jax
import jax.numpy as jnp
from jax.experimental import pallas as pl
from jax.experimental.pallas import tpu as pltpu


def _round_up(x: int, m: int) -> int:
    return ((x + m - 1) // m) * m


def _mlp_kernel(x_ref,
                w1_ref, b1_ref, w2_ref, b2_ref,
                wh_ref, bh_ref, wo_ref, bo_ref,
                out_ref):
    """One batch tile: shared trunk + fused policy/value heads, all in VMEM."""
    cd = w1_ref.dtype                     # compute dtype (f32 or bf16)
    x = x_ref[...].astype(cd)             # in-kernel cast (no wrapper HBM pass)

    # shared_net: Linear(F,128) -> ReLU -> Linear(128,128) -> ReLU
    h = jnp.dot(x, w1_ref[...], preferred_element_type=jnp.float32) + b1_ref[...]
    h = jnp.maximum(h, 0.0).astype(cd)
    h = jnp.dot(h, w2_ref[...], preferred_element_type=jnp.float32) + b2_ref[...]
    h = jnp.maximum(h, 0.0).astype(cd)

    # fused heads layer 1: [128 -> 64|64] as a single 128-wide matmul
    t = jnp.dot(h, wh_ref[...], preferred_element_type=jnp.float32) + bh_ref[...]
    t = jnp.maximum(t, 0.0).astype(cd)

    # fused final layer: block-diagonal [128 -> action_dim+1], padded to out_pad
    out = jnp.dot(t, wo_ref[...], preferred_element_type=jnp.float32) + bo_ref[...]
    out_ref[...] = out.astype(out_ref.dtype)


def pack_params(params, compute_dtype=jnp.bfloat16):
    """Fuse/pack weights ONCE (call when params are created/updated, not per
    forward). Returns (packed_arrays, action_dim)."""
    action_dim = params["wp2"].shape[1]
    out_pad = _round_up(action_dim + 1, 8)
    if out_pad > 128:
        out_pad = _round_up(out_pad, 128)

    # wp1|wv1 -> [128, 128], bp1|bv1 -> [1, 128]
    w_heads = jnp.concatenate([params["wp1"], params["wv1"]], axis=1)
    b_heads = jnp.concatenate([params["bp1"], params["bv1"]], axis=1)

    # block-diagonal final layer: rows 0:64 feed policy cols, rows 64:128 feed
    # the value column.
    w_out = jnp.zeros((128, out_pad), jnp.float32)
    w_out = w_out.at[:64, :action_dim].set(params["wp2"])
    w_out = w_out.at[64:, action_dim:action_dim + 1].set(params["wv2"])
    b_out = jnp.zeros((1, out_pad), jnp.float32)
    b_out = b_out.at[:, :action_dim].set(params["bp2"])
    b_out = b_out.at[:, action_dim:action_dim + 1].set(params["bv2"])

    cd = compute_dtype
    packed = dict(
        w1=params["w1"].astype(cd), b1=params["b1"].astype(jnp.float32),
        w2=params["w2"].astype(cd), b2=params["b2"].astype(jnp.float32),
        wh=w_heads.astype(cd),      bh=b_heads.astype(jnp.float32),
        wo=w_out.astype(cd),        bo=b_out.astype(jnp.float32),
    )
    return packed, action_dim


def custom_network_forward(features, packed, action_dim, *, batch_tile=4096):
    """features: [B, F] float32, packed: output of pack_params.
    Returns (policy [B, action_dim] f32, value [B, 1] f32)."""
    B, F = features.shape
    out_pad = packed["wo"].shape[1]

    # Batch tiling: large tiles amortize per-grid-step overhead; keep >= 2 tiles
    # when B is large so the "parallel" batch axis can shard across v7x's two
    # TensorCores; tile = ceil(B/n) rounded to 8 keeps padding waste < 8 rows
    # per tile.
    n_tiles = max(1, -(-B // batch_tile))
    if B >= 512:
        n_tiles = max(n_tiles, 2)
    tb = _round_up(-(-B // n_tiles), 8)
    b_pad = n_tiles * tb

    x = features
    if b_pad != B:
        x = jnp.pad(x, ((0, b_pad - B), (0, 0)))

    def resident(shape):
        # weights/biases: same block every grid step -> stay VMEM-resident
        return pl.BlockSpec(shape, lambda i: (0, 0))

    args = (x, packed["w1"], packed["b1"], packed["w2"], packed["b2"],
            packed["wh"], packed["bh"], packed["wo"], packed["bo"])

    in_specs = [pl.BlockSpec((tb, F), lambda i: (i, 0))]
    in_specs += [resident(a.shape) for a in args[1:]]
    out_specs = pl.BlockSpec((tb, out_pad), lambda i: (i, 0))
    out_shape = jax.ShapeDtypeStruct((b_pad, out_pad), jnp.float32)

    flops = 2 * b_pad * (F * 128 + 128 * 128 + 128 * 128 + 128 * out_pad)
    bytes_accessed = (sum(int(a.size) * a.dtype.itemsize for a in args)
                      + b_pad * out_pad * 4)

    out = pl.pallas_call(
        _mlp_kernel,
        grid=(n_tiles,),
        in_specs=in_specs,
        out_specs=out_specs,
        out_shape=out_shape,
        compiler_params=pltpu.CompilerParams(
            dimension_semantics=("parallel",),       # megacore-shard batch (v7x)
            vmem_limit_bytes=32 * 1024 * 1024,
        ),
        cost_estimate=pl.CostEstimate(
            flops=flops, transcendentals=0, bytes_accessed=bytes_accessed),
    )(*args)

    policy = out[:B, :action_dim]
    value = out[:B, action_dim:action_dim + 1]
    return policy, value


def init_params(key, feature_dim, action_dim):
    """PyTorch nn.Linear default init (uniform +-1/sqrt(fan_in)).
    Weights stored as [in, out]; biases as [1, out]."""
    def linear(key, fan_in, fan_out):
        kw, kb = jax.random.split(key)
        bound = 1.0 / jnp.sqrt(float(fan_in))
        w = jax.random.uniform(kw, (fan_in, fan_out), jnp.float32, -bound, bound)
        b = jax.random.uniform(kb, (1, fan_out), jnp.float32, -bound, bound)
        return w, b

    keys = jax.random.split(key, 6)
    w1, b1 = linear(keys[0], feature_dim, 128)
    w2, b2 = linear(keys[1], 128, 128)
    wp1, bp1 = linear(keys[2], 128, 64)
    wp2, bp2 = linear(keys[3], 64, action_dim)
    wv1, bv1 = linear(keys[4], 128, 64)
    wv2, bv2 = linear(keys[5], 64, 1)
    return dict(w1=w1, b1=b1, w2=w2, b2=b2,
                wp1=wp1, bp1=bp1, wp2=wp2, bp2=bp2,
                wv1=wv1, bv1=bv1, wv2=wv2, bv2=bv2)


def reference_forward(features, params):
    """Pure-JAX f32 reference with identical semantics."""
    h = jnp.maximum(features @ params["w1"] + params["b1"], 0.0)
    h = jnp.maximum(h @ params["w2"] + params["b2"], 0.0)
    p = jnp.maximum(h @ params["wp1"] + params["bp1"], 0.0)
    policy = p @ params["wp2"] + params["bp2"]
    v = jnp.maximum(h @ params["wv1"] + params["bv1"], 0.0)
    value = v @ params["wv2"] + params["bv2"]
    return policy, value


if __name__ == "__main__":
    feature_dim = 32
    action_dim = 8
    batch = 2

    key = jax.random.PRNGKey(0)
    k_params, k_feat, k_feat2, k_feat3 = jax.random.split(key, 4)
    params = init_params(k_params, feature_dim, action_dim)
    features = jax.random.normal(k_feat, (batch, feature_dim), jnp.float32)

    ref_policy, ref_value = reference_forward(features, params)

    # Pack once per compute dtype (one-time cost, hoisted out of the forward).
    packed_f32, adim = pack_params(params, compute_dtype=jnp.float32)
    packed_bf16, _ = pack_params(params, compute_dtype=jnp.bfloat16)

    # f32 compute path: tight check against reference.
    policy, value = custom_network_forward(features, packed_f32, adim)
    policy = jax.block_until_ready(policy)
    value = jax.block_until_ready(value)
    assert policy.shape == (batch, action_dim)
    assert value.shape == (batch, 1)
    assert jnp.allclose(policy, ref_policy, atol=1e-4, rtol=1e-4)
    assert jnp.allclose(value, ref_value, atol=1e-4, rtol=1e-4)

    # bf16 compute path: loose check against f32 reference.
    policy_bf, value_bf = custom_network_forward(features, packed_bf16, adim)
    policy_bf = jax.block_until_ready(policy_bf)
    value_bf = jax.block_until_ready(value_bf)
    assert jnp.allclose(policy_bf, ref_policy, atol=5e-2, rtol=5e-2)
    assert jnp.allclose(value_bf, ref_value, atol=5e-2, rtol=5e-2)

    # Ragged / multi-tile batch path (exercises batch grid + padding).
    feats_big = jax.random.normal(k_feat2, (300, feature_dim), jnp.float32)
    pol_big, val_big = custom_network_forward(feats_big, packed_f32, adim,
                                              batch_tile=128)
    pol_big = jax.block_until_ready(pol_big)
    ref_pol_big, ref_val_big = reference_forward(feats_big, params)
    assert pol_big.shape == (300, action_dim)
    assert val_big.shape == (300, 1)
    assert jnp.allclose(pol_big, ref_pol_big, atol=1e-4, rtol=1e-4)
    assert jnp.allclose(val_big, ref_val_big, atol=1e-4, rtol=1e-4)

    # Medium batch with default tile: exercises the >=2-tile (v7x megacore) path.
    feats_med = jax.random.normal(k_feat3, (640, feature_dim), jnp.float32)
    pol_med, val_med = custom_network_forward(feats_med, packed_f32, adim)
    pol_med = jax.block_until_ready(pol_med)
    ref_pol_med, ref_val_med = reference_forward(feats_med, params)
    assert jnp.allclose(pol_med, ref_pol_med, atol=1e-4, rtol=1e-4)
    assert jnp.allclose(val_med, ref_val_med, atol=1e-4, rtol=1e-4)

    print("KERNEL_OK")
</pallas_src>

<mosaic_0001>
module attributes {stable_mosaic.version = 11 : i64} {
  func.func @_mlp_kernel(%arg0: i32, %arg1: memref<8x32xf32, #tpu.memory_space<vmem>>, %arg2: memref<32x128xf32, #tpu.memory_space<vmem>>, %arg3: memref<1x128xf32, #tpu.memory_space<vmem>>, %arg4: memref<128x128xf32, #tpu.memory_space<vmem>>, %arg5: memref<1x128xf32, #tpu.memory_space<vmem>>, %arg6: memref<128x128xf32, #tpu.memory_space<vmem>>, %arg7: memref<1x128xf32, #tpu.memory_space<vmem>>, %arg8: memref<128x16xf32, #tpu.memory_space<vmem>>, %arg9: memref<1x16xf32, #tpu.memory_space<vmem>>, %arg10: memref<8x16xf32, #tpu.memory_space<vmem>>) attributes {dimension_semantics = [#tpu.dimension_semantics<parallel>], iteration_bounds = array<i64: 1>, scalar_prefetch = 0 : i64, scratch_operands = 0 : i64, tpu.core_type = #tpu.core_type<tc>, window_params = [{transform_indices = @transform_0, window_bounds = array<i64: 8, 32>}, {pipeline_mode = #tpu.pipeline_mode<synchronous>, transform_indices = @transform_1, window_bounds = array<i64: 32, 128>}, {pipeline_mode = #tpu.pipeline_mode<synchronous>, transform_indices = @transform_2, window_bounds = array<i64: 1, 128>}, {pipeline_mode = #tpu.pipeline_mode<synchronous>, transform_indices = @transform_3, window_bounds = array<i64: 128, 128>}, {pipeline_mode = #tpu.pipeline_mode<synchronous>, transform_indices = @transform_4, window_bounds = array<i64: 1, 128>}, {pipeline_mode = #tpu.pipeline_mode<synchronous>, transform_indices = @transform_5, window_bounds = array<i64: 128, 128>}, {pipeline_mode = #tpu.pipeline_mode<synchronous>, transform_indices = @transform_6, window_bounds = array<i64: 1, 128>}, {pipeline_mode = #tpu.pipeline_mode<synchronous>, transform_indices = @transform_7, window_bounds = array<i64: 128, 16>}, {pipeline_mode = #tpu.pipeline_mode<synchronous>, transform_indices = @transform_8, window_bounds = array<i64: 1, 16>}, {transform_indices = @transform_9, window_bounds = array<i64: 8, 16>}]} {
    %c0 = arith.constant 0 : index
    %c0_0 = arith.constant 0 : index
    %0 = vector.load %arg1[%c0, %c0_0] : memref<8x32xf32, #tpu.memory_space<vmem>>, vector<8x32xf32>
    %c0_1 = arith.constant 0 : index
    %c0_2 = arith.constant 0 : index
    %1 = vector.load %arg2[%c0_1, %c0_2] : memref<32x128xf32, #tpu.memory_space<vmem>>, vector<32x128xf32>
    %cst = arith.constant dense<0.000000e+00> : vector<8x128xf32>
    %2 = tpu.matmul %0, %1, %cst {dimension_numbers = #tpu.dot_dimension_numbers<[1], [0], [0], [1], [0, 0, 1, 1], [], []>} : vector<8x32xf32>, vector<32x128xf32>, vector<8x128xf32> -> vector<8x128xf32>
    %c0_3 = arith.constant 0 : index
    %c0_4 = arith.constant 0 : index
    %3 = vector.load %arg3[%c0_3, %c0_4] : memref<1x128xf32, #tpu.memory_space<vmem>>, vector<1x128xf32>
    %4 = vector.broadcast %3 : vector<1x128xf32> to vector<8x128xf32>
    %5 = arith.addf %2, %4 : vector<8x128xf32>
    %cst_5 = arith.constant 0.000000e+00 : f32
    %6 = vector.broadcast %cst_5 : f32 to vector<8x128xf32>
    %7 = arith.maximumf %5, %6 : vector<8x128xf32>
    %c0_6 = arith.constant 0 : index
    %c0_7 = arith.constant 0 : index
    %8 = vector.load %arg4[%c0_6, %c0_7] : memref<128x128xf32, #tpu.memory_space<vmem>>, vector<128x128xf32>
    %cst_8 = arith.constant dense<0.000000e+00> : vector<8x128xf32>
    %9 = tpu.matmul %7, %8, %cst_8 {dimension_numbers = #tpu.dot_dimension_numbers<[1], [0], [0], [1], [0, 0, 1, 1], [], []>} : vector<8x128xf32>, vector<128x128xf32>, vector<8x128xf32> -> vector<8x128xf32>
    %c0_9 = arith.constant 0 : index
    %c0_10 = arith.constant 0 : index
    %10 = vector.load %arg5[%c0_9, %c0_10] : memref<1x128xf32, #tpu.memory_space<vmem>>, vector<1x128xf32>
    %11 = vector.broadcast %10 : vector<1x128xf32> to vector<8x128xf32>
    %12 = arith.addf %9, %11 : vector<8x128xf32>
    %cst_11 = arith.constant 0.000000e+00 : f32
    %13 = vector.broadcast %cst_11 : f32 to vector<8x128xf32>
    %14 = arith.maximumf %12, %13 : vector<8x128xf32>
    %c0_12 = arith.constant 0 : index
    %c0_13 = arith.constant 0 : index
    %15 = vector.load %arg6[%c0_12, %c0_13] : memref<128x128xf32, #tpu.memory_space<vmem>>, vector<128x128xf32>
    %cst_14 = arith.constant dense<0.000000e+00> : vector<8x128xf32>
    %16 = tpu.matmul %14, %15, %cst_14 {dimension_numbers = #tpu.dot_dimension_numbers<[1], [0], [0], [1], [0, 0, 1, 1], [], []>} : vector<8x128xf32>, vector<128x128xf32>, vector<8x128xf32> -> vector<8x128xf32>
    %c0_15 = arith.constant 0 : index
    %c0_16 = arith.constant 0 : index
    %17 = vector.load %arg7[%c0_15, %c0_16] : memref<1x128xf32, #tpu.memory_space<vmem>>, vector<1x128xf32>
    %18 = vector.broadcast %17 : vector<1x128xf32> to vector<8x128xf32>
    %19 = arith.addf %16, %18 : vector<8x128xf32>
    %cst_17 = arith.constant 0.000000e+00 : f32
    %20 = vector.broadcast %cst_17 : f32 to vector<8x128xf32>
    %21 = arith.maximumf %19, %20 : vector<8x128xf32>
    %c0_18 = arith.constant 0 : index
    %c0_19 = arith.constant 0 : index
    %22 = vector.load %arg8[%c0_18, %c0_19] : memref<128x16xf32, #tpu.memory_space<vmem>>, vector<128x16xf32>
    %cst_20 = arith.constant dense<0.000000e+00> : vector<8x16xf32>
    %23 = tpu.matmul %21, %22, %cst_20 {dimension_numbers = #tpu.dot_dimension_numbers<[1], [0], [0], [1], [0, 0, 1, 1], [], []>} : vector<8x128xf32>, vector<128x16xf32>, vector<8x16xf32> -> vector<8x16xf32>
    %c0_21 = arith.constant 0 : index
    %c0_22 = arith.constant 0 : index
    %24 = vector.load %arg9[%c0_21, %c0_22] : memref<1x16xf32, #tpu.memory_space<vmem>>, vector<1x16xf32>
    %25 = vector.broadcast %24 : vector<1x16xf32> to vector<8x16xf32>
    %26 = arith.addf %23, %25 : vector<8x16xf32>
    %c0_23 = arith.constant 0 : index
    %c0_24 = arith.constant 0 : index
    %27 = vector.load %arg10[%c0_23, %c0_24] : memref<8x16xf32, #tpu.memory_space<vmem>>, vector<8x16xf32>
    tpu.vector_store %arg10[%c0_23, %c0_24], %26 {strides = array<i32>} : memref<8x16xf32, #tpu.memory_space<vmem>>, vector<8x16xf32>,
    return
  }
  func.func @transform_0(%arg0: i32) -> (i32, i32) {
    %c0_i32 = arith.constant 0 : i32
    %c0_i32_0 = arith.constant 0 : i32
    return %arg0, %c0_i32 : i32, i32
  }
  func.func @transform_1(%arg0: i32) -> (i32, i32) {
    %c0_i32 = arith.constant 0 : i32
    %c0_i32_0 = arith.constant 0 : i32
    %c0_i32_1 = arith.constant 0 : i32
    return %c0_i32, %c0_i32_0 : i32, i32
  }
  func.func @transform_2(%arg0: i32) -> (i32, i32) {
    %c0_i32 = arith.constant 0 : i32
    %c0_i32_0 = arith.constant 0 : i32
    %c0_i32_1 = arith.constant 0 : i32
    return %c0_i32, %c0_i32_0 : i32, i32
  }
  func.func @transform_3(%arg0: i32) -> (i32, i32) {
    %c0_i32 = arith.constant 0 : i32
    %c0_i32_0 = arith.constant 0 : i32
    %c0_i32_1 = arith.constant 0 : i32
    return %c0_i32, %c0_i32_0 : i32, i32
  }
  func.func @transform_4(%arg0: i32) -> (i32, i32) {
    %c0_i32 = arith.constant 0 : i32
    %c0_i32_0 = arith.constant 0 : i32
    %c0_i32_1 = arith.constant 0 : i32
    return %c0_i32, %c0_i32_0 : i32, i32
  }
  func.func @transform_5(%arg0: i32) -> (i32, i32) {
    %c0_i32 = arith.constant 0 : i32
    %c0_i32_0 = arith.constant 0 : i32
    %c0_i32_1 = arith.constant 0 : i32
    return %c0_i32, %c0_i32_0 : i32, i32
  }
  func.func @transform_6(%arg0: i32) -> (i32, i32) {
    %c0_i32 = arith.constant 0 : i32
    %c0_i32_0 = arith.constant 0 : i32
    %c0_i32_1 = arith.constant 0 : i32
    return %c0_i32, %c0_i32_0 : i32, i32
  }
  func.func @transform_7(%arg0: i32) -> (i32, i32) {
    %c0_i32 = arith.constant 0 : i32
    %c0_i32_0 = arith.constant 0 : i32
    %c0_i32_1 = arith.constant 0 : i32
    return %c0_i32, %c0_i32_0 : i32, i32
  }
  func.func @transform_8(%arg0: i32) -> (i32, i32) {
    %c0_i32 = arith.constant 0 : i32
    %c0_i32_0 = arith.constant 0 : i32
    %c0_i32_1 = arith.constant 0 : i32
    return %c0_i32, %c0_i32_0 : i32, i32
  }
  func.func @transform_9(%arg0: i32) -> (i32, i32) {
    %c0_i32 = arith.constant 0 : i32
    %c0_i32_0 = arith.constant 0 : i32
    return %arg0, %c0_i32 : i32, i32
  }
}

</mosaic_0001>

<llo_original>
// kernel: tpu_custom_call.1
$region0: #{tpu_custom_call.1}
  #allocation0 [shape = 'u32[]', space=smem, size = 0x4, offset = 0x4, fixed_abs, tag = 'smem constant byte address 0x4 - core index']
  #allocation1 [shape = 'u32[72,128]{1,0:T(1,128)}', space=vmem, size = 0x9000, scoped, tag = 'internal scratch']
  %s0 = inlined_call_operand.vmem [shape: f32[8,32], index: 0, kind: input, shape index: {}]
  %s1 = inlined_call_operand.hbm [shape: f32[32,128], index: 1, kind: input, shape index: {}]
  %s2 = inlined_call_operand.vmem [shape: f32[1,128], index: 2, kind: input, shape index: {}]
  %s3 = inlined_call_operand.vmem [shape: f32[128,128], index: 3, kind: input, shape index: {}]
  %s4 = inlined_call_operand.vmem [shape: f32[1,128], index: 4, kind: input, shape index: {}]
  %s5 = inlined_call_operand.hbm [shape: f32[128,128], index: 5, kind: input, shape index: {}]
  %s6 = inlined_call_operand.vmem [shape: f32[1,128], index: 6, kind: input, shape index: {}]
  %s7 = inlined_call_operand.vmem [shape: f32[128,16], index: 7, kind: input, shape index: {}]
  %s8 = inlined_call_operand.vmem [shape: f32[1,16], index: 8, kind: input, shape index: {}]
  %s9 = inlined_call_operand.hbm [shape: f32[8,16], index: 9, kind: output, shape index: {}]
  %s10 = sld [smem:[#allocation0]]
  $region54: #{tpu_custom_call.1} parent=0
    _
  %s12 = ssub.s32 1, %s10
  %s13 = scalar_select 0, %s12, %s10
  $region1: #{tpu_custom_call.1} parent=0
    #allocation2 [shape = 'u8[16384]{0}', space=vmem, size = 0x4000, scoped, tag = 'input window, operand 1, single buffered']
    #allocation3 [shape = 's32[1]{0}', space=sflag, size = 0x4, scoped, tag = 'scoped memory for tpu_custom_call.1']
    #allocation4 [shape = 's32[1]{0}', space=sflag, size = 0x4, scoped, tag = 'scoped memory for tpu_custom_call.1']
    #allocation5 [shape = 'u8[65536]{0}', space=vmem, size = 0x10000, scoped, tag = 'input window, operand 5, single buffered']
    #allocation6 [shape = 's32[1]{0}', space=sflag, size = 0x4, scoped, tag = 'scoped memory for tpu_custom_call.1']
    #allocation7 [shape = 'u8[4096]{0}', space=vmem, size = 0x1000, scoped, tag = 'output window, operand 0, single buffered']
    %14 = vsyncpa [#allocation3], 0
    %15 = vsyncpa [#allocation6], 0
    %16 = vsyncpa [#allocation4], 0
    // Predicated region
    $region2: #{tpu_custom_call.1} parent=1 // pred_check
      _
    $region3: #{tpu_custom_call.1} parent=1 // pred_check_branch
      %18 = sbr.rel (0) target = $region5
    $region4: #{tpu_custom_call.1} parent=1 // pred_region
      _
    $region5: #{tpu_custom_call.1} parent=1 // pred_fallthru
      _
    // Predicated region
    $region6: #{tpu_custom_call.1} parent=1 // pred_check
      _
    $region7: #{tpu_custom_call.1} parent=1 // pred_check_branch
      %20 = sbr.rel (0) target = $region9
    $region8: #{tpu_custom_call.1} parent=1 // pred_region
      %22 = vsyncadd [#allocation3], 0
      %s23 = sshll.u32 %s1, 4
      %s24 = int_to_ptr.hbm [resolvable:$true] %s23
      %s25 = sshll.u32 [#allocation2], 4
      %s26 = int_to_ptr.vmem [resolvable:$true] %s25
      %31 = dma.hbm_to_vmem [thread:$0]  %s24, 512, %s26, [#allocation3], 128, 128, 8
    $region9: #{tpu_custom_call.1} parent=1 // pred_fallthru
      _
    // Predicated region
    $region10: #{tpu_custom_call.1} parent=1 // pred_check
      _
    $region11: #{tpu_custom_call.1} parent=1 // pred_check_branch
      %33 = sbr.rel (0) target = $region13
    $region12: #{tpu_custom_call.1} parent=1 // pred_region
      _
    $region13: #{tpu_custom_call.1} parent=1 // pred_fallthru
      _
    // Predicated region
    $region14: #{tpu_custom_call.1} parent=1 // pred_check
      _
    $region15: #{tpu_custom_call.1} parent=1 // pred_check_branch
      %35 = sbr.rel (0) target = $region17
    $region16: #{tpu_custom_call.1} parent=1 // pred_region
      _
    $region17: #{tpu_custom_call.1} parent=1 // pred_fallthru
      _
    // Predicated region
    $region18: #{tpu_custom_call.1} parent=1 // pred_check
      _
    $region19: #{tpu_custom_call.1} parent=1 // pred_check_branch
      %37 = sbr.rel (0) target = $region21
    $region20: #{tpu_custom_call.1} parent=1 // pred_region
      _
    $region21: #{tpu_custom_call.1} parent=1 // pred_fallthru
      _
    // Predicated region
    $region22: #{tpu_custom_call.1} parent=1 // pred_check
      _
    $region23: #{tpu_custom_call.1} parent=1 // pred_check_branch
      %39 = sbr.rel (0) target = $region25
    $region24: #{tpu_custom_call.1} parent=1 // pred_region
      %41 = vsyncadd [#allocation6], 0
      %s42 = sshll.u32 %s5, 4
      %s43 = int_to_ptr.hbm [resolvable:$true] %s42
      %s44 = sshll.u32 [#allocation5], 4
      %s45 = int_to_ptr.vmem [resolvable:$true] %s44
      %50 = dma.hbm_to_vmem [thread:$0]  %s43, 2048, %s45, [#allocation6], 128, 128, 8
    $region25: #{tpu_custom_call.1} parent=1 // pred_fallthru
      _
    // Predicated region
    $region26: #{tpu_custom_call.1} parent=1 // pred_check
      _
    $region27: #{tpu_custom_call.1} parent=1 // pred_check_branch
      %52 = sbr.rel (0) target = $region29
    $region28: #{tpu_custom_call.1} parent=1 // pred_region
      _
    $region29: #{tpu_custom_call.1} parent=1 // pred_fallthru
      _
    // Predicated region
    $region30: #{tpu_custom_call.1} parent=1 // pred_check
      _
    $region31: #{tpu_custom_call.1} parent=1 // pred_check_branch
      %54 = sbr.rel (0) target = $region33
    $region32: #{tpu_custom_call.1} parent=1 // pred_region
      _
    $region33: #{tpu_custom_call.1} parent=1 // pred_fallthru
      _
    // Predicated region
    $region34: #{tpu_custom_call.1} parent=1 // pred_check
      _
    $region35: #{tpu_custom_call.1} parent=1 // pred_check_branch
      %56 = sbr.rel (0) target = $region37
    $region36: #{tpu_custom_call.1} parent=1 // pred_region
      _
    $region37: #{tpu_custom_call.1} parent=1 // pred_fallthru
      _
    // Predicated region
    $region38: #{tpu_custom_call.1} parent=1 // pred_check
      _
    $region39: #{tpu_custom_call.1} parent=1 // pred_check_branch
      %58 = sbr.rel (0) target = $region41
    $region40: #{tpu_custom_call.1} parent=1 // pred_region
      %60 = dma.done [#allocation3], 512
    $region41: #{tpu_custom_call.1} parent=1 // pred_fallthru
      _
    // Predicated region
    $region42: #{tpu_custom_call.1} parent=1 // pred_check
      _
    $region43: #{tpu_custom_call.1} parent=1 // pred_check_branch
      %62 = sbr.rel (0) target = $region45
    $region44: #{tpu_custom_call.1} parent=1 // pred_region
      %64 = dma.done [#allocation6], 2048
    $region45: #{tpu_custom_call.1} parent=1 // pred_fallthru
      _
    %v65 = vld [vmem:[%s0] sm:$0xff]
    %v66 = vld [vmem:[#allocation2] sm:$0xff]
    %v67 = vld [vmem:[#allocation2 + $0x8] sm:$0xff]
    %v68 = vld [vmem:[#allocation2 + $0x10] sm:$0xff]
    %v69 = vld [vmem:[#allocation2 + $0x18] sm:$0xff]
    %v70 = vld [vmem:[%s2] sm:$0x1]
    %v72 = vperm.slane %v70, 0
    %vm74 = vcmask 261120
    %v76 = vsel %vm74, %v65, 0
    %78 = vmatpush.msra.mxu0 0.0
    %79 = vmatpush.msra.mxu0 0.0
    %80 = vmatpush.msra.mxu0 0.0
    %81 = vmatpush.msra.mxu0 0.0
    %82 = vmatpush.msra.mxu0 0.0
    %83 = vmatpush.msra.mxu0 0.0
    %84 = vmatpush.msra.mxu0 0.0
    %85 = vmatpush.msra.mxu0 0.0
    %86 = vmatpush.msra.mxu0 0.0
    %87 = vmatpush.msra.mxu0 0.0
    %88 = vmatpush.msra.mxu0 0.0
    %89 = vmatpush.msra.mxu0 0.0
    %90 = vmatpush.msra.mxu0 %v69
    %91 = vmatpush.msra.mxu0 %v68
    %92 = vmatpush.msra.mxu0 %v67
    %93 = vmatpush.msra.mxu0 %v66
    %94 = vmatmul.f32.gmra.mxu0 %v76
    %v95 = vpop.f32.mrf.mxu0
    %v96 = vadd.f32 %v72, %v95
    %97 = vdwg.mxu0
    %v98 = vmax.f32 %v96, 0.0
    %v99 = vld [vmem:[%s3] sm:$0xff]
    %v100 = vld [vmem:[%s3 + $0x8] sm:$0xff]
    %v101 = vld [vmem:[%s3 + $0x10] sm:$0xff]
    %v102 = vld [vmem:[%s3 + $0x18] sm:$0xff]
    %v103 = vld [vmem:[%s3 + $0x20] sm:$0xff]
    %v104 = vld [vmem:[%s3 + $0x28] sm:$0xff]
    %v105 = vld [vmem:[%s3 + $0x30] sm:$0xff]
    %v106 = vld [vmem:[%s3 + $0x38] sm:$0xff]
    %v107 = vld [vmem:[%s3 + $0x40] sm:$0xff]
    %v108 = vld [vmem:[%s3 + $0x48] sm:$0xff]
    %v109 = vld [vmem:[%s3 + $0x50] sm:$0xff]
    %v110 = vld [vmem:[%s3 + $0x58] sm:$0xff]
    %v111 = vld [vmem:[%s3 + $0x60] sm:$0xff]
    %v112 = vld [vmem:[%s3 + $0x68] sm:$0xff]
    %v113 = vld [vmem:[%s3 + $0x70] sm:$0xff]
    %v114 = vld [vmem:[%s3 + $0x78] sm:$0xff]
    %v115 = vld [vmem:[%s4] sm:$0x1]
    %v117 = vperm.slane %v115, 0
    %119 = vmatpush.msra.mxu0 %v114
    %120 = vmatpush.msra.mxu0 %v113
    %121 = vmatpush.msra.mxu0 %v112
    %122 = vmatpush.msra.mxu0 %v111
    %123 = vmatpush.msra.mxu0 %v110
    %124 = vmatpush.msra.mxu0 %v109
    %125 = vmatpush.msra.mxu0 %v108
    %126 = vmatpush.msra.mxu0 %v107
    %127 = vmatpush.msra.mxu0 %v106
    %128 = vmatpush.msra.mxu0 %v105
    %129 = vmatpush.msra.mxu0 %v104
    %130 = vmatpush.msra.mxu0 %v103
    %131 = vmatpush.msra.mxu0 %v102
    %132 = vmatpush.msra.mxu0 %v101
    %133 = vmatpush.msra.mxu0 %v100
    %134 = vmatpush.msra.mxu0 %v99
    %135 = vmatmul.f32.gmra.mxu0 %v98
    %v136 = vpop.f32.mrf.mxu0
    %v137 = vadd.f32 %v117, %v136
    %138 = vdwg.mxu0
    %v139 = vmax.f32 %v137, 0.0
    %v140 = vld [vmem:[#allocation5] sm:$0xff]
    %v141 = vld [vmem:[#allocation5 + $0x8] sm:$0xff]
    %v142 = vld [vmem:[#allocation5 + $0x10] sm:$0xff]
    %v143 = vld [vmem:[#allocation5 + $0x18] sm:$0xff]
    %v144 = vld [vmem:[#allocation5 + $0x20] sm:$0xff]
    %v145 = vld [vmem:[#allocation5 + $0x28] sm:$0xff]
    %v146 = vld [vmem:[#allocation5 + $0x30] sm:$0xff]
    %v147 = vld [vmem:[#allocation5 + $0x38] sm:$0xff]
    %v148 = vld [vmem:[#allocation5 + $0x40] sm:$0xff]
    %v149 = vld [vmem:[#allocation5 + $0x48] sm:$0xff]
    %v150 = vld [vmem:[#allocation5 + $0x50] sm:$0xff]
    %v151 = vld [vmem:[#allocation5 + $0x58] sm:$0xff]
    %v152 = vld [vmem:[#allocation5 + $0x60] sm:$0xff]
    %v153 = vld [vmem:[#allocation5 + $0x68] sm:$0xff]
    %v154 = vld [vmem:[#allocation5 + $0x70] sm:$0xff]
    %v155 = vld [vmem:[#allocation5 + $0x78] sm:$0xff]
    %v156 = vld [vmem:[%s6] sm:$0x1]
    %v158 = vperm.slane %v156, 0
    %160 = vmatpush.msra.mxu0 %v155
    %161 = vmatpush.msra.mxu0 %v154
    %162 = vmatpush.msra.mxu0 %v153
    %163 = vmatpush.msra.mxu0 %v152
    %164 = vmatpush.msra.mxu0 %v151
    %165 = vmatpush.msra.mxu0 %v150
    %166 = vmatpush.msra.mxu0 %v149
    %167 = vmatpush.msra.mxu0 %v148
    %168 = vmatpush.msra.mxu0 %v147
    %169 = vmatpush.msra.mxu0 %v146
    %170 = vmatpush.msra.mxu0 %v145
    %171 = vmatpush.msra.mxu0 %v144
    %172 = vmatpush.msra.mxu0 %v143
    %173 = vmatpush.msra.mxu0 %v142
    %174 = vmatpush.msra.mxu0 %v141
    %175 = vmatpush.msra.mxu0 %v140
    %176 = vmatmul.f32.gmra.mxu0 %v139
    %v177 = vpop.f32.mrf.mxu0
    %v178 = vadd.f32 %v158, %v177
    %179 = vdwg.mxu0
    %v180 = vmax.f32 %v178, 0.0
    %v181 = vld [vmem:[%s7] sm:$0xff]
    %v182 = vld [vmem:[%s7 + $0x8] sm:$0xff]
    %v183 = vld [vmem:[%s7 + $0x10] sm:$0xff]
    %v184 = vld [vmem:[%s7 + $0x18] sm:$0xff]
    %v185 = vld [vmem:[%s7 + $0x20] sm:$0xff]
    %v186 = vld [vmem:[%s7 + $0x28] sm:$0xff]
    %v187 = vld [vmem:[%s7 + $0x30] sm:$0xff]
    %v188 = vld [vmem:[%s7 + $0x38] sm:$0xff]
    %v189 = vld [vmem:[%s7 + $0x40] sm:$0xff]
    %v190 = vld [vmem:[%s7 + $0x48] sm:$0xff]
    %v191 = vld [vmem:[%s7 + $0x50] sm:$0xff]
    %v192 = vld [vmem:[%s7 + $0x58] sm:$0xff]
    %v193 = vld [vmem:[%s7 + $0x60] sm:$0xff]
    %v194 = vld [vmem:[%s7 + $0x68] sm:$0xff]
    %v195 = vld [vmem:[%s7 + $0x70] sm:$0xff]
    %v196 = vld [vmem:[%s7 + $0x78] sm:$0xff]
    %v197 = vld [vmem:[%s8] sm:$0x1]
    %v199 = vperm.slane %v197, 0
    %201 = vmatpush.msra.mxu0 %v196
    %202 = vmatpush.msra.mxu0 %v195
    %203 = vmatpush.msra.mxu0 %v194
    %204 = vmatpush.msra.mxu0 %v193
    %205 = vmatpush.msra.mxu0 %v192
    %206 = vmatpush.msra.mxu0 %v191
    %207 = vmatpush.msra.mxu0 %v190
    %208 = vmatpush.msra.mxu0 %v189
    %209 = vmatpush.msra.mxu0 %v188
    %210 = vmatpush.msra.mxu0 %v187
    %211 = vmatpush.msra.mxu0 %v186
    %212 = vmatpush.msra.mxu0 %v185
    %213 = vmatpush.msra.mxu0 %v184
    %214 = vmatpush.msra.mxu0 %v183
    %215 = vmatpush.msra.mxu0 %v182
    %216 = vmatpush.msra.mxu0 %v181
    %217 = vmatmul.f32.gmra.mxu0 %v180
    %v218 = vpop.f32.mrf.mxu0
    %v219 = vadd.f32 %v199, %v218
    %220 = vdwg.mxu0
    %vm221 = vcmask 130048
    %222 = vst.msk [vmem:[#allocation7] sm:$0xff] %vm221, %v219
    // Predicated region
    $region46: #{tpu_custom_call.1} parent=1 // pred_check
      _
    $region47: #{tpu_custom_call.1} parent=1 // pred_check_branch
      %224 = sbr.rel (0) target = $region49
    $region48: #{tpu_custom_call.1} parent=1 // pred_region
      %226 = vsyncadd [#allocation4], 0
      %s228 = sshll.u32 [#allocation7], 4
      %s229 = int_to_ptr.vmem [resolvable:$true] %s228
      %s230 = sshll.u32 %s9, 4
      %s231 = int_to_ptr.hbm [resolvable:$true] %s230
      %233 = dma.vmem_to_hbm [thread:$0]  %s229, 128, %s231, [#allocation4]
    $region49: #{tpu_custom_call.1} parent=1 // pred_fallthru
      _
    // Predicated region
    $region50: #{tpu_custom_call.1} parent=1 // pred_check
      _
    $region51: #{tpu_custom_call.1} parent=1 // pred_check_branch
      %235 = sbr.rel (0) target = $region53
    $region52: #{tpu_custom_call.1} parent=1 // pred_region
      %237 = dma.done [#allocation4], 128
    $region53: #{tpu_custom_call.1} parent=1 // pred_fallthru
      _
    %238 = vsyncpa [#allocation3], 1
    %239 = vsyncpa [#allocation6], 1
    %240 = vsyncpa [#allocation4], 1

</llo_original>
